<compile_context>
chip_gen: v7x
topology: tpu7x:2x2x1
jax: 0.10.0
libtpu: 0.0.40
codegen_flags: <defaults>
</compile_context>

<pallas_src>
import jax
import jax.numpy as jnp
from jax import lax
from jax.experimental import pallas as pl
from jax.experimental.pallas import tpu as pltpu

L = 16            # DNA sequence length (rows of x_dna)
DNA_CH = 14       # x_dna feature channels (len(shape_transform) == 14)
CH_PAD = 16       # DNA_CH zero-padded so conv1 K-blocks stay 8-aligned
HID = 8           # CNN / MLP hidden size
OUT = 4           # final per-position outputs
# packed buffer rows: conv1 (3*16) + conv2 (3*8) + fc1 (8) + m2 (8) + m3 (8) + biases (8)
W_ROWS = 3 * CH_PAD + 3 * HID + 3 * HID + HID   # = 104


def _model_kernel(x_ref, w_ref, out_ref):
    f32 = jnp.float32
    xx = x_ref[...]                                  # (2L, CH_PAD) both strands, padded

    # per-strand boundary masks for zero-padded 'same' k=3 convolutions
    row = lax.broadcasted_iota(jnp.int32, (2 * L, 1), 0)
    first_row = (row == 0) | (row == L)
    last_row = (row == L - 1) | (row == 2 * L - 1)

    # ---- carve the packed parameter buffer (static, 8-aligned row slices) ----
    w1cat = w_ref[0:48, :]          # [w1_m1; w1_0; w1_p1] each padded to 16 rows
    w2cat = w_ref[48:72, :]         # [w2_m1; w2_0; w2_p1]
    w_fc1 = w_ref[72:80, :]         # (k=1 conv) folded into MLP linear 1
    w_m2 = w_ref[80:88, :]
    w_m3 = w_ref[88:96, :]          # MLP linear 3, cols OUT.. zero, pre-scaled by 1/sigmoid(t)
    b1 = w_ref[96:97, :]
    b2 = w_ref[97:98, :]
    b_fc1 = w_ref[98:99, :]
    b_m2 = w_ref[99:100, :]
    b_m3 = w_ref[100:101, :]        # pre-scaled by 1/sigmoid(t)

    def conv3(h, wcat, b):
        # taps fused along K: one (2L, 3*Cin) x (3*Cin, HID) matmul; zero padding at
        # the ends of EACH strand via the boundary masks (rolls never mix strands).
        h_prev = jnp.where(first_row, 0.0, pltpu.roll(h, shift=1, axis=0))
        h_next = jnp.where(last_row, 0.0, pltpu.roll(h, shift=2 * L - 1, axis=0))
        hcat = jnp.concatenate([h_prev, h, h_next], axis=1)
        return jnp.dot(hcat, wcat, preferred_element_type=f32) + b

    # ---- CNN (both strands at once) ----
    h = jnp.maximum(conv3(xx, w1cat, b1), 0.0)
    h = jnp.maximum(conv3(h, w2cat, b2), 0.0)

    # ---- MLP([HID, HID, HID, OUT]) with fc folded into linear 1 ----
    # TODO(synk): MLP class definition not provided; assuming ReLU between hidden
    # layers and no activation on the final layer (the fc -> linear1 fold relies
    # on there being no activation between them, matching that assumption).
    h = jnp.maximum(jnp.dot(h, w_fc1, preferred_element_type=f32) + b_fc1, 0.0)
    h = jnp.maximum(jnp.dot(h, w_m2, preferred_element_type=f32) + b_m2, 0.0)
    # last linear already includes the 1/sigmoid(global_temp) scale; lane-dense store
    out_ref[...] = jnp.dot(h, w_m3, preferred_element_type=f32) + b_m3   # (2L, HID)


def pack_params(params):
    """Fold fc into MLP linear 1, fold 1/sigmoid(temp) into the last linear, and
    pack ALL weights + biases into one (104, 8) f32 buffer.

    Done once at parameter-init time (must be re-run if global_temp changes).
    """
    (w1, b1, w2, b2, w3, b3, m1, mb1, m2, mb2, m3, mb3, temp) = params
    f32 = jnp.float32
    hi = lax.Precision.HIGHEST

    def pad_rows(w, rows):
        return jnp.concatenate(
            [w, jnp.zeros((rows - w.shape[0], w.shape[1]), f32)], axis=0)

    inv_sig = 1.0 + jnp.exp(-temp[0, 0])                  # == 1 / sigmoid(temp)

    w_fc1 = jnp.dot(w3, m1, precision=hi)                 # exact fold: no act between
    b_fc1 = jnp.dot(b3, m1, precision=hi) + mb1
    w_m3p = jnp.concatenate([m3, jnp.zeros((HID, HID - OUT), f32)], axis=1) * inv_sig
    b_m3p = jnp.concatenate([mb3, jnp.zeros((1, HID - OUT), f32)], axis=1) * inv_sig

    w1cat = jnp.concatenate(
        [pad_rows(w1[0], CH_PAD), pad_rows(w1[1], CH_PAD), pad_rows(w1[2], CH_PAD)],
        axis=0)                                           # (48, 8)
    w2cat = jnp.concatenate([w2[0], w2[1], w2[2]], axis=0)  # (24, 8)

    wpack = jnp.concatenate(
        [w1cat, w2cat, w_fc1, m2, w_m3p,
         b1, b2, b_fc1, mb2, b_m3p, jnp.zeros((3, HID), f32)], axis=0).astype(f32)
    assert wpack.shape == (W_ROWS, HID)
    return wpack


def _prepare_input(x_dna):
    """Build the stacked (strand1; strand2) activation, channel-padded to CH_PAD."""
    f32 = jnp.float32
    st = jnp.array([-1, -1, 1, 1, 1, 1, -1, 1, 1, -1, 1, 1, 1, 1], f32)
    x_rc = jnp.flip(x_dna, axis=0) * st[None, :]
    rolled = jnp.roll(x_rc, shift=-1, axis=0)             # row i <- row i+1, wrap
    x_rc = jnp.concatenate([x_rc[:, :6], rolled[:, 6:12], x_rc[:, 12:]], axis=1)
    xx = jnp.concatenate([x_dna, x_rc], axis=0)            # (2L, 14)
    return jnp.pad(xx, ((0, 0), (0, CH_PAD - DNA_CH)))     # (2L, 16)


@jax.jit
def model_forward(x_dna, wpack):
    """x_dna: (L, DNA_CH) float32.  Returns (2*L, OUT)."""
    xx = _prepare_input(x_dna)
    y = pl.pallas_call(
        _model_kernel,
        out_shape=jax.ShapeDtypeStruct((2 * L, HID), jnp.float32),
    )(xx, wpack)
    # TODO(synk): for real workloads with many sequences, add a batch ("parallel")
    # grid dimension so v7x's second TensorCore isn't idle and per-call overhead
    # is amortized; a single (32,16) sequence is pure fixed overhead.
    return y[:, :OUT]


def init_params(key):
    ks = jax.random.split(key, 13)
    f = jnp.float32
    # Conv1d weights stored as (k, C_in, C_out) == W_torch[:, :, k].T per tap
    w1 = 0.1 * jax.random.normal(ks[0], (3, DNA_CH, HID), f)
    b1 = 0.1 * jax.random.normal(ks[1], (1, HID), f)
    w2 = 0.1 * jax.random.normal(ks[2], (3, HID, HID), f)
    b2 = 0.1 * jax.random.normal(ks[3], (1, HID), f)
    w3 = 0.1 * jax.random.normal(ks[4], (HID, HID), f)       # fc, kernel_size=1
    b3 = 0.1 * jax.random.normal(ks[5], (1, HID), f)
    m1 = 0.1 * jax.random.normal(ks[6], (HID, HID), f)
    mb1 = 0.1 * jax.random.normal(ks[7], (1, HID), f)
    m2 = 0.1 * jax.random.normal(ks[8], (HID, HID), f)
    mb2 = 0.1 * jax.random.normal(ks[9], (1, HID), f)
    m3 = 0.1 * jax.random.normal(ks[10], (HID, OUT), f)
    mb3 = 0.1 * jax.random.normal(ks[11], (1, OUT), f)
    temp = jax.random.normal(ks[12], (1, 1), f)               # global_temp
    return (w1, b1, w2, b2, w3, b3, m1, mb1, m2, mb2, m3, mb3, temp)


def _reference_forward(x_dna, params):
    """Pure-JAX reference (unfolded, per-strand) for correctness checking."""
    (w1, b1, w2, b2, w3, b3, m1, mb1, m2, mb2, m3, mb3, temp) = params
    hi = lax.Precision.HIGHEST
    dot = lambda a, b: jnp.dot(a, b, precision=hi)
    st = jnp.array([-1, -1, 1, 1, 1, 1, -1, 1, 1, -1, 1, 1, 1, 1], jnp.float32)
    x_rc = jnp.flip(x_dna, axis=0) * st[None, :]
    tmp = x_rc[0, 6:12]
    x_rc = x_rc.at[:-1, 6:12].set(x_rc[1:, 6:12])
    x_rc = x_rc.at[-1, 6:12].set(tmp)

    def conv3(h, w, b):
        zero = jnp.zeros((1, h.shape[1]), h.dtype)
        hp = jnp.concatenate([zero, h[:-1]], axis=0)
        hn = jnp.concatenate([h[1:], zero], axis=0)
        return dot(hp, w[0]) + dot(h, w[1]) + dot(hn, w[2]) + b

    def strand(h):
        h = jax.nn.relu(conv3(h, w1, b1))
        h = jax.nn.relu(conv3(h, w2, b2))
        h = dot(h, w3) + b3
        h = jax.nn.relu(dot(h, m1) + mb1)
        h = jax.nn.relu(dot(h, m2) + mb2)
        return dot(h, m3) + mb3

    out = jnp.concatenate([strand(x_dna), strand(x_rc)], axis=0)
    return out / jax.nn.sigmoid(temp[0, 0])


if __name__ == "__main__":
    key = jax.random.PRNGKey(0)
    k_x, k_p = jax.random.split(key)
    x_dna = jax.random.normal(k_x, (L, DNA_CH), jnp.float32)
    params = init_params(k_p)
    wpack = pack_params(params)           # packed once at init time

    out = model_forward(x_dna, wpack)
    jax.block_until_ready(out)
    assert out.shape == (2 * L, OUT), out.shape
    assert bool(jnp.all(jnp.isfinite(out)))

    ref = _reference_forward(x_dna, params)
    max_err = float(jnp.max(jnp.abs(out - ref)))
    assert max_err < 1e-4, f"mismatch vs pure-JAX reference: max_err={max_err}"
    print("KERNEL_OK")
</pallas_src>

<mosaic_0001>
module attributes {stable_mosaic.version = 11 : i64} {
  func.func @_model_kernel(%arg0: memref<32x16xf32, #tpu.memory_space<vmem>>, %arg1: memref<104x8xf32, #tpu.memory_space<vmem>>, %arg2: memref<32x8xf32, #tpu.memory_space<vmem>>) attributes {dimension_semantics = [], scalar_prefetch = 0 : i64, scratch_operands = 0 : i64, tpu.core_type = #tpu.core_type<tc>} {
    %c0 = arith.constant 0 : index
    %c0_0 = arith.constant 0 : index
    %0 = vector.load %arg0[%c0, %c0_0] : memref<32x16xf32, #tpu.memory_space<vmem>>, vector<32x16xf32>
    %1 = tpu.iota {dimensions = array<i32: 0>} : vector<32x1xi32>
    %c0_i32 = arith.constant 0 : i32
    %2 = vector.broadcast %c0_i32 : i32 to vector<32x1xi32>
    %3 = arith.cmpi eq, %1, %2 : vector<32x1xi32>
    %c16_i32 = arith.constant 16 : i32
    %4 = vector.broadcast %c16_i32 : i32 to vector<32x1xi32>
    %5 = arith.cmpi eq, %1, %4 : vector<32x1xi32>
    %6 = arith.ori %3, %5 : vector<32x1xi1>
    %c15_i32 = arith.constant 15 : i32
    %7 = vector.broadcast %c15_i32 : i32 to vector<32x1xi32>
    %8 = arith.cmpi eq, %1, %7 : vector<32x1xi32>
    %c31_i32 = arith.constant 31 : i32
    %9 = vector.broadcast %c31_i32 : i32 to vector<32x1xi32>
    %10 = arith.cmpi eq, %1, %9 : vector<32x1xi32>
    %11 = arith.ori %8, %10 : vector<32x1xi1>
    %c0_1 = arith.constant 0 : index
    %c0_2 = arith.constant 0 : index
    %12 = vector.load %arg1[%c0_1, %c0_2] : memref<104x8xf32, #tpu.memory_space<vmem>>, vector<48x8xf32>
    %c48 = arith.constant 48 : index
    %c0_3 = arith.constant 0 : index
    %13 = vector.load %arg1[%c48, %c0_3] : memref<104x8xf32, #tpu.memory_space<vmem>>, vector<24x8xf32>
    %c72 = arith.constant 72 : index
    %c0_4 = arith.constant 0 : index
    %14 = vector.load %arg1[%c72, %c0_4] : memref<104x8xf32, #tpu.memory_space<vmem>>, vector<8x8xf32>
    %c80 = arith.constant 80 : index
    %c0_5 = arith.constant 0 : index
    %15 = vector.load %arg1[%c80, %c0_5] : memref<104x8xf32, #tpu.memory_space<vmem>>, vector<8x8xf32>
    %c88 = arith.constant 88 : index
    %c0_6 = arith.constant 0 : index
    %16 = vector.load %arg1[%c88, %c0_6] : memref<104x8xf32, #tpu.memory_space<vmem>>, vector<8x8xf32>
    %c96 = arith.constant 96 : index
    %c0_7 = arith.constant 0 : index
    %17 = vector.load %arg1[%c96, %c0_7] : memref<104x8xf32, #tpu.memory_space<vmem>>, vector<1x8xf32>
    %c97 = arith.constant 97 : index
    %c0_8 = arith.constant 0 : index
    %18 = vector.load %arg1[%c97, %c0_8] : memref<104x8xf32, #tpu.memory_space<vmem>>, vector<1x8xf32>
    %c98 = arith.constant 98 : index
    %c0_9 = arith.constant 0 : index
    %19 = vector.load %arg1[%c98, %c0_9] : memref<104x8xf32, #tpu.memory_space<vmem>>, vector<1x8xf32>
    %c99 = arith.constant 99 : index
    %c0_10 = arith.constant 0 : index
    %20 = vector.load %arg1[%c99, %c0_10] : memref<104x8xf32, #tpu.memory_space<vmem>>, vector<1x8xf32>
    %c100 = arith.constant 100 : index
    %c0_11 = arith.constant 0 : index
    %21 = vector.load %arg1[%c100, %c0_11] : memref<104x8xf32, #tpu.memory_space<vmem>>, vector<1x8xf32>
    %c1_i32 = arith.constant 1 : i32
    %22 = tpu.dynamic_rotate %0 by %c1_i32 dim 0 : vector<32x16xf32>, i32 -> vector<32x16xf32>
    %cst = arith.constant 0.000000e+00 : f32
    %23 = vector.shape_cast %6 : vector<32x1xi1> to vector<32x1xi1>
    %24 = vector.broadcast %23 : vector<32x1xi1> to vector<32x16xi1>
    %25 = vector.broadcast %cst : f32 to vector<32x16xf32>
    %26 = arith.select %24, %25, %22 : vector<32x16xi1>, vector<32x16xf32>
    %c31_i32_12 = arith.constant 31 : i32
    %27 = tpu.dynamic_rotate %0 by %c31_i32_12 dim 0 : vector<32x16xf32>, i32 -> vector<32x16xf32>
    %cst_13 = arith.constant 0.000000e+00 : f32
    %28 = vector.shape_cast %11 : vector<32x1xi1> to vector<32x1xi1>
    %29 = vector.broadcast %28 : vector<32x1xi1> to vector<32x16xi1>
    %30 = vector.broadcast %cst_13 : f32 to vector<32x16xf32>
    %31 = arith.select %29, %30, %27 : vector<32x16xi1>, vector<32x16xf32>
    %32 = tpu.concatenate %26, %0, %31 in 1 : vector<32x16xf32>, vector<32x16xf32>, vector<32x16xf32> -> vector<32x48xf32>
    %cst_14 = arith.constant dense<0.000000e+00> : vector<32x8xf32>
    %33 = tpu.matmul %32, %12, %cst_14 {dimension_numbers = #tpu.dot_dimension_numbers<[1], [0], [0], [1], [0, 0, 1, 1], [], []>} : vector<32x48xf32>, vector<48x8xf32>, vector<32x8xf32> -> vector<32x8xf32>
    %34 = vector.broadcast %17 : vector<1x8xf32> to vector<32x8xf32>
    %35 = arith.addf %33, %34 : vector<32x8xf32>
    %cst_15 = arith.constant 0.000000e+00 : f32
    %36 = vector.broadcast %cst_15 : f32 to vector<32x8xf32>
    %37 = arith.maximumf %35, %36 : vector<32x8xf32>
    %c1_i32_16 = arith.constant 1 : i32
    %38 = tpu.dynamic_rotate %37 by %c1_i32_16 dim 0 : vector<32x8xf32>, i32 -> vector<32x8xf32>
    %cst_17 = arith.constant 0.000000e+00 : f32
    %39 = vector.shape_cast %6 : vector<32x1xi1> to vector<32x1xi1>
    %40 = vector.broadcast %39 : vector<32x1xi1> to vector<32x8xi1>
    %41 = vector.broadcast %cst_17 : f32 to vector<32x8xf32>
    %42 = arith.select %40, %41, %38 : vector<32x8xi1>, vector<32x8xf32>
    %c31_i32_18 = arith.constant 31 : i32
    %43 = tpu.dynamic_rotate %37 by %c31_i32_18 dim 0 : vector<32x8xf32>, i32 -> vector<32x8xf32>
    %cst_19 = arith.constant 0.000000e+00 : f32
    %44 = vector.shape_cast %11 : vector<32x1xi1> to vector<32x1xi1>
    %45 = vector.broadcast %44 : vector<32x1xi1> to vector<32x8xi1>
    %46 = vector.broadcast %cst_19 : f32 to vector<32x8xf32>
    %47 = arith.select %45, %46, %43 : vector<32x8xi1>, vector<32x8xf32>
    %48 = tpu.concatenate %42, %37, %47 in 1 : vector<32x8xf32>, vector<32x8xf32>, vector<32x8xf32> -> vector<32x24xf32>
    %cst_20 = arith.constant dense<0.000000e+00> : vector<32x8xf32>
    %49 = tpu.matmul %48, %13, %cst_20 {dimension_numbers = #tpu.dot_dimension_numbers<[1], [0], [0], [1], [0, 0, 1, 1], [], []>} : vector<32x24xf32>, vector<24x8xf32>, vector<32x8xf32> -> vector<32x8xf32>
    %50 = vector.broadcast %18 : vector<1x8xf32> to vector<32x8xf32>
    %51 = arith.addf %49, %50 : vector<32x8xf32>
    %cst_21 = arith.constant 0.000000e+00 : f32
    %52 = vector.broadcast %cst_21 : f32 to vector<32x8xf32>
    %53 = arith.maximumf %51, %52 : vector<32x8xf32>
    %cst_22 = arith.constant dense<0.000000e+00> : vector<32x8xf32>
    %54 = tpu.matmul %53, %14, %cst_22 {dimension_numbers = #tpu.dot_dimension_numbers<[1], [0], [0], [1], [0, 0, 1, 1], [], []>} : vector<32x8xf32>, vector<8x8xf32>, vector<32x8xf32> -> vector<32x8xf32>
    %55 = vector.broadcast %19 : vector<1x8xf32> to vector<32x8xf32>
    %56 = arith.addf %54, %55 : vector<32x8xf32>
    %cst_23 = arith.constant 0.000000e+00 : f32
    %57 = vector.broadcast %cst_23 : f32 to vector<32x8xf32>
    %58 = arith.maximumf %56, %57 : vector<32x8xf32>
    %cst_24 = arith.constant dense<0.000000e+00> : vector<32x8xf32>
    %59 = tpu.matmul %58, %15, %cst_24 {dimension_numbers = #tpu.dot_dimension_numbers<[1], [0], [0], [1], [0, 0, 1, 1], [], []>} : vector<32x8xf32>, vector<8x8xf32>, vector<32x8xf32> -> vector<32x8xf32>
    %60 = vector.broadcast %20 : vector<1x8xf32> to vector<32x8xf32>
    %61 = arith.addf %59, %60 : vector<32x8xf32>
    %cst_25 = arith.constant 0.000000e+00 : f32
    %62 = vector.broadcast %cst_25 : f32 to vector<32x8xf32>
    %63 = arith.maximumf %61, %62 : vector<32x8xf32>
    %cst_26 = arith.constant dense<0.000000e+00> : vector<32x8xf32>
    %64 = tpu.matmul %63, %16, %cst_26 {dimension_numbers = #tpu.dot_dimension_numbers<[1], [0], [0], [1], [0, 0, 1, 1], [], []>} : vector<32x8xf32>, vector<8x8xf32>, vector<32x8xf32> -> vector<32x8xf32>
    %65 = vector.broadcast %21 : vector<1x8xf32> to vector<32x8xf32>
    %66 = arith.addf %64, %65 : vector<32x8xf32>
    %c0_27 = arith.constant 0 : index
    %c0_28 = arith.constant 0 : index
    %67 = vector.load %arg2[%c0_27, %c0_28] : memref<32x8xf32, #tpu.memory_space<vmem>>, vector<32x8xf32>
    tpu.vector_store %arg2[%c0_27, %c0_28], %66 {strides = array<i32>} : memref<32x8xf32, #tpu.memory_space<vmem>>, vector<32x8xf32>,
    return
  }
}

</mosaic_0001>

<llo_original>
// kernel: model_forward.1
$region0: #{model_forward.1}
  #allocation0 [shape = 'u32[]', space=smem, size = 0x4, offset = 0x4, fixed_abs, tag = 'smem constant byte address 0x4 - core index']
  #allocation1 [shape = 'u32[144,128]{1,0:T(1,128)}', space=vmem, size = 0x12000, scoped, tag = 'internal scratch']
  %s0 = inlined_call_operand.vmem [shape: f32[32,16], index: 0, kind: input, shape index: {}]
  %s1 = inlined_call_operand.vmem [shape: f32[104,8], index: 1, kind: input, shape index: {}]
  %s2 = inlined_call_operand.vmem [shape: f32[32,8], index: 2, kind: output, shape index: {}]
  %s3 = sld [smem:[#allocation0]]
  $region18: #{model_forward.1} parent=0
    _
  %s5 = ssub.s32 1, %s3
  %s6 = scalar_select 0, %s5, %s3
  // Predicated region
  $region2: #{model_forward.1} parent=0 // pred_check
    _
  $region3: #{model_forward.1} parent=0 // pred_check_branch
    %8 = sbr.rel (0) target = $region5
  $region4: #{model_forward.1} parent=0 // pred_region
    _
  $region5: #{model_forward.1} parent=0 // pred_fallthru
    _
  // Predicated region
  $region6: #{model_forward.1} parent=0 // pred_check
    _
  $region7: #{model_forward.1} parent=0 // pred_check_branch
    %10 = sbr.rel (0) target = $region9
  $region8: #{model_forward.1} parent=0 // pred_region
    _
  $region9: #{model_forward.1} parent=0 // pred_fallthru
    _
  %v11 = vld [vmem:[%s0] sm:$0xff]
  %v12 = vld [vmem:[%s0 + $0x8] sm:$0xff]
  %v13 = vld [vmem:[%s0 + $0x10] sm:$0xff]
  %v14 = vld [vmem:[%s0 + $0x18] sm:$0xff]
  %v15 = vlaneseq
  %v16 = vshrl.u32 %v15, 7
  %v17 = vadd.s32 %v16, 8
  %v18 = vadd.s32 %v16, 16
  %v19 = vadd.s32 %v16, 24
  %vm20 = vcmp.eq.s32.totalorder %v16, 0
  %vm21 = vcmp.eq.s32.totalorder %v17, 0
  %vm22 = vcmp.eq.s32.totalorder %v18, 0
  %vm23 = vcmp.eq.s32.totalorder %v19, 0
  %vm24 = vcmp.eq.s32.totalorder %v16, 16
  %vm25 = vcmp.eq.s32.totalorder %v17, 16
  %vm26 = vcmp.eq.s32.totalorder %v18, 16
  %vm27 = vcmp.eq.s32.totalorder %v19, 16
  %vm28 = vmor %vm20, %vm24
  %vm29 = vmor %vm21, %vm25
  %vm30 = vmor %vm22, %vm26
  %vm31 = vmor %vm23, %vm27
  %vm32 = vcmp.eq.s32.totalorder %v16, 15
  %vm33 = vcmp.eq.s32.totalorder %v17, 15
  %vm34 = vcmp.eq.s32.totalorder %v18, 15
  %vm35 = vcmp.eq.s32.totalorder %v19, 15
  %vm36 = vcmp.eq.s32.totalorder %v16, 31
  %vm37 = vcmp.eq.s32.totalorder %v17, 31
  %vm38 = vcmp.eq.s32.totalorder %v18, 31
  %vm39 = vcmp.eq.s32.totalorder %v19, 31
  %vm40 = vmor %vm32, %vm36
  %vm41 = vmor %vm33, %vm37
  %vm42 = vmor %vm34, %vm38
  %vm43 = vmor %vm35, %vm39
  %v44 = vld [vmem:[%s1] sm:$0xff]
  %v45 = vld [vmem:[%s1 + $0x8] sm:$0xff]
  %v46 = vld [vmem:[%s1 + $0x10] sm:$0xff]
  %v47 = vld [vmem:[%s1 + $0x18] sm:$0xff]
  %v48 = vld [vmem:[%s1 + $0x20] sm:$0xff]
  %v49 = vld [vmem:[%s1 + $0x28] sm:$0xff]
  %v50 = vld [vmem:[%s1 + $0x30] sm:$0xff]
  %v51 = vld [vmem:[%s1 + $0x38] sm:$0xff]
  %v52 = vld [vmem:[%s1 + $0x40] sm:$0xff]
  %v53 = vld [vmem:[%s1 + $0x48] sm:$0xff]
  %v54 = vld [vmem:[%s1 + $0x50] sm:$0xff]
  %v55 = vld [vmem:[%s1 + $0x58] sm:$0xff]
  %v56 = vld [vmem:[%s1 + $0x60] sm:$0x1]
  %v57 = vld [vmem:[%s1 + $0x61] sm:$0x1]
  %v58 = vld [vmem:[%s1 + $0x62] sm:$0x1]
  %v59 = vld [vmem:[%s1 + $0x63] sm:$0x1]
  %v60 = vld [vmem:[%s1 + $0x64] sm:$0x1]
  %v61 = vrot.slane %v11, 7
  %v62 = vrot.slane %v12, 7
  %v63 = vrot.slane %v13, 7
  %v64 = vrot.slane %v14, 7
  %vm65 = vcmp.lt.s32.totalorder %v16, 1
  %v66 = vsel %vm65, %v63, %v64
  %v67 = vsel %vm65, %v62, %v63
  %v68 = vsel %vm65, %v61, %v62
  %v69 = vsel %vm65, %v64, %v61
  %v70 = vsel %vm28, 1, 0
  %v71 = vsel %vm29, 1, 0
  %v72 = vsel %vm30, 1, 0
  %v73 = vsel %vm31, 1, 0
  %vm74 = vcmp.eq.s32.totalorder %v70, 1
  %vm75 = vcmp.eq.s32.totalorder %v71, 1
  %vm76 = vcmp.eq.s32.totalorder %v72, 1
  %vm77 = vcmp.eq.s32.totalorder %v73, 1
  %v78 = vsel %vm74, 0.0, %v69
  %v79 = vsel %vm75, 0.0, %v68
  %v80 = vsel %vm76, 0.0, %v67
  %v81 = vsel %vm77, 0.0, %v66
  %v82 = vrot.slane %v11, 1
  %v83 = vrot.slane %v12, 1
  %v84 = vrot.slane %v13, 1
  %v85 = vrot.slane %v14, 1
  %vm86 = vcmp.lt.s32.totalorder %v16, 7
  %v87 = vsel %vm86, %v84, %v85
  %v88 = vsel %vm86, %v83, %v84
  %v89 = vsel %vm86, %v82, %v83
  %v90 = vsel %vm86, %v85, %v82
  %v91 = vsel %vm40, 1, 0
  %v92 = vsel %vm41, 1, 0
  %v93 = vsel %vm42, 1, 0
  %v94 = vsel %vm43, 1, 0
  %vm95 = vcmp.eq.s32.totalorder %v91, 1
  %vm96 = vcmp.eq.s32.totalorder %v92, 1
  %vm97 = vcmp.eq.s32.totalorder %v93, 1
  %vm98 = vcmp.eq.s32.totalorder %v94, 1
  %v99 = vsel %vm95, 0.0, %v89
  %v100 = vsel %vm96, 0.0, %v88
  %v101 = vsel %vm97, 0.0, %v87
  %v102 = vsel %vm98, 0.0, %v90
  %107 = vrot.lane.b32.xlu0 %v11, 16
  %v108 = vpop.permute.xlu0 %107
  %109 = vrot.lane.b32.xlu0 %v12, 16
  %v110 = vpop.permute.xlu0 %109
  %111 = vrot.lane.b32.xlu0 %v13, 16
  %v112 = vpop.permute.xlu0 %111
  %113 = vrot.lane.b32.xlu0 %v14, 16
  %v114 = vpop.permute.xlu0 %113
  %123 = vrot.lane.b32.xlu0 %v99, 32
  %v124 = vpop.permute.xlu0 %123
  %125 = vrot.lane.b32.xlu0 %v100, 32
  %v126 = vpop.permute.xlu0 %125
  %127 = vrot.lane.b32.xlu0 %v101, 32
  %v128 = vpop.permute.xlu0 %127
  %129 = vrot.lane.b32.xlu0 %v102, 32
  %v130 = vpop.permute.xlu0 %129
  %vm135 = vcmask 130048
  %v136 = vsel %vm135, %v78, %v108
  %v137 = vsel %vm135, %v79, %v110
  %v138 = vsel %vm135, %v80, %v112
  %v139 = vsel %vm135, %v81, %v114
  %vm140 = vcmask 261120
  %v141 = vsel %vm140, %v136, %v124
  %v142 = vsel %vm140, %v137, %v126
  %v143 = vsel %vm140, %v138, %v128
  %v144 = vsel %vm140, %v139, %v130
  %v145 = vlaneseq
  %v146 = vshrl.u32 %v145, 7
  %v147 = vsub.s32 0, %v146
  %v148 = vrot.slane %v56, %v147
  %vm149 = vcmask 392192
  %v151 = vsel %vm149, %v141, 0
  %v154 = vsel %vm149, %v142, 0
  %v157 = vsel %vm149, %v143, 0
  %v160 = vsel %vm149, %v144, 0
  %162 = vmatprep.subr.mxu0 0.0
  %163 = vmatpush1.msra.mxu0 %v44
  %164 = vmatprep.subr.mxu0 0.0
  %165 = vmatpush1.msra.mxu0 %v45
  %166 = vmatprep.subr.mxu0 0.0
  %167 = vmatpush1.msra.mxu0 %v46
  %168 = vmatprep.subr.mxu0 0.0
  %169 = vmatpush1.msra.mxu0 %v47
  %170 = vmatprep.subr.mxu0 0.0
  %171 = vmatpush1.msra.mxu0 %v48
  %172 = vmatprep.subr.mxu0 0.0
  %173 = vmatpush1.msra.mxu0 %v49
  %174 = vmatprep.subr.mxu0 0.0
  %175 = vmatpush1.msra.mxu0 0.0
  %176 = vmatprep.subr.mxu0 0.0
  %177 = vmatpush1.msra.mxu0 0.0
  %178 = vmatprep.subr.mxu0 0.0
  %179 = vmatpush1.msra.mxu0 0.0
  %180 = vmatprep.subr.mxu0 0.0
  %181 = vmatpush1.msra.mxu0 0.0
  %182 = vmatprep.subr.mxu0 0.0
  %183 = vmatpush1.msra.mxu0 0.0
  %184 = vmatprep.subr.mxu0 0.0
  %185 = vmatpush1.msra.mxu0 0.0
  %186 = vmatprep.subr.mxu0 0.0
  %187 = vmatpush1.msra.mxu0 0.0
  %188 = vmatprep.subr.mxu0 0.0
  %189 = vmatpush1.msra.mxu0 0.0
  %190 = vmatprep.subr.mxu0 0.0
  %191 = vmatpush1.msra.mxu0 0.0
  %192 = vmatprep.subr.mxu0 0.0
  %193 = vmatpush1.msra.mxu0 0.0
  %194 = vmatprep.subr.mxu0 0.0
  %195 = vmatpush1.msra.mxu0 0.0
  %196 = vmatprep.subr.mxu0 0.0
  %197 = vmatpush1.msra.mxu0 0.0
  %198 = vmatprep.subr.mxu0 0.0
  %199 = vmatpush1.msra.mxu0 0.0
  %200 = vmatprep.subr.mxu0 0.0
  %201 = vmatpush1.msra.mxu0 0.0
  %202 = vmatprep.subr.mxu0 0.0
  %203 = vmatpush1.msra.mxu0 0.0
  %204 = vmatprep.subr.mxu0 0.0
  %205 = vmatpush1.msra.mxu0 0.0
  %206 = vmatprep.subr.mxu0 0.0
  %207 = vmatpush1.msra.mxu0 0.0
  %208 = vmatprep.subr.mxu0 0.0
  %209 = vmatpush1.msra.mxu0 0.0
  %210 = vmatprep.subr.mxu0 0.0
  %211 = vmatpush1.msra.mxu0 0.0
  %212 = vmatprep.subr.mxu0 0.0
  %213 = vmatpush1.msra.mxu0 0.0
  %214 = vmatprep.subr.mxu0 0.0
  %215 = vmatpush1.msra.mxu0 0.0
  %216 = vmatprep.subr.mxu0 0.0
  %217 = vmatpush1.msra.mxu0 0.0
  %218 = vmatprep.subr.mxu0 0.0
  %219 = vmatpush1.msra.mxu0 0.0
  %220 = vmatprep.subr.mxu0 0.0
  %221 = vmatpush1.msra.mxu0 0.0
  %222 = vmatprep.subr.mxu0 0.0
  %223 = vmatpush1.msra.mxu0 0.0
  %224 = vmatprep.subr.mxu0 0.0
  %225 = vmatpush1.msra.mxu0 0.0
  %226 = vmatprep.mubr.f32.mxu0 0.0
  %227 = vmatmul.mubr.f32.gmra.mrb[0].mxu0 %v151
  %v228 = vpop.f32.mrb[0].mxu0
  %v229 = vadd.f32 %v148, %v228
  %v230 = vpop.f32.mrb[0].mxu0
  %231 = vmatprep.mubr.f32.mxu0 0.0
  %232 = vmatmul.mubr.f32.gmra.mrb[0].mxu0 %v154
  %v233 = vpop.f32.mrb[0].mxu0
  %v234 = vadd.f32 %v148, %v233
  %v235 = vpop.f32.mrb[0].mxu0
  %236 = vmatprep.mubr.f32.mxu0 0.0
  %237 = vmatmul.mubr.f32.gmra.mrb[0].mxu0 %v157
  %v238 = vpop.f32.mrb[0].mxu0
  %v239 = vadd.f32 %v148, %v238
  %v240 = vpop.f32.mrb[0].mxu0
  %241 = vmatprep.mubr.f32.mxu0 0.0
  %242 = vmatmul.mubr.f32.gmra.mrb[0].mxu0 %v160
  %v243 = vpop.f32.mrb[0].mxu0
  %v244 = vadd.f32 %v148, %v243
  %v245 = vpop.f32.mrb[0].mxu0
  %246 = vdwg.mxu0
  %v247 = vmax.f32 %v229, 0.0
  %v248 = vmax.f32 %v234, 0.0
  %v249 = vmax.f32 %v239, 0.0
  %v250 = vmax.f32 %v244, 0.0
  %v251 = vrot.slane %v247, 7
  %v252 = vrot.slane %v248, 7
  %v253 = vrot.slane %v249, 7
  %v254 = vrot.slane %v250, 7
  %v255 = vsel %vm65, %v253, %v254
  %v256 = vsel %vm65, %v252, %v253
  %v257 = vsel %vm65, %v251, %v252
  %v258 = vsel %vm65, %v254, %v251
  %v259 = vsel %vm74, 0.0, %v258
  %v260 = vsel %vm75, 0.0, %v257
  %v261 = vsel %vm76, 0.0, %v256
  %v262 = vsel %vm77, 0.0, %v255
  %v263 = vrot.slane %v247, 1
  %v264 = vrot.slane %v248, 1
  %v265 = vrot.slane %v249, 1
  %v266 = vrot.slane %v250, 1
  %v267 = vsel %vm86, %v265, %v266
  %v268 = vsel %vm86, %v264, %v265
  %v269 = vsel %vm86, %v263, %v264
  %v270 = vsel %vm86, %v266, %v263
  %v271 = vsel %vm95, 0.0, %v269
  %v272 = vsel %vm96, 0.0, %v268
  %v273 = vsel %vm97, 0.0, %v267
  %v274 = vsel %vm98, 0.0, %v270
  %279 = vrot.lane.b32.xlu0 %v247, 8
  %v280 = vpop.permute.xlu0 %279
  %281 = vrot.lane.b32.xlu0 %v248, 8
  %v282 = vpop.permute.xlu0 %281
  %283 = vrot.lane.b32.xlu0 %v249, 8
  %v284 = vpop.permute.xlu0 %283
  %285 = vrot.lane.b32.xlu0 %v250, 8
  %v286 = vpop.permute.xlu0 %285
  %295 = vrot.lane.b32.xlu0 %v271, 16
  %v296 = vpop.permute.xlu0 %295
  %297 = vrot.lane.b32.xlu0 %v272, 16
  %v298 = vpop.permute.xlu0 %297
  %299 = vrot.lane.b32.xlu0 %v273, 16
  %v300 = vpop.permute.xlu0 %299
  %301 = vrot.lane.b32.xlu0 %v274, 16
  %v302 = vpop.permute.xlu0 %301
  %vm307 = vcmask 64512
  %v308 = vsel %vm307, %v259, %v280
  %v309 = vsel %vm307, %v260, %v282
  %v310 = vsel %vm307, %v261, %v284
  %v311 = vsel %vm307, %v262, %v286
  %v312 = vsel %vm135, %v308, %v296
  %v313 = vsel %vm135, %v309, %v298
  %v314 = vsel %vm135, %v310, %v300
  %v315 = vsel %vm135, %v311, %v302
  %v316 = vlaneseq
  %v317 = vshrl.u32 %v316, 7
  %v318 = vsub.s32 0, %v317
  %v319 = vrot.slane %v57, %v318
  %vm320 = vcmask 195584
  %v322 = vsel %vm320, %v312, 0
  %v325 = vsel %vm320, %v313, 0
  %v328 = vsel %vm320, %v314, 0
  %v331 = vsel %vm320, %v315, 0
  %333 = vmatprep.subr.mxu0 0.0
  %334 = vmatpush1.msra.mxu0 %v50
  %335 = vmatprep.subr.mxu0 0.0
  %336 = vmatpush1.msra.mxu0 %v51
  %337 = vmatprep.subr.mxu0 0.0
  %338 = vmatpush1.msra.mxu0 %v52
  %339 = vmatprep.subr.mxu0 0.0
  %340 = vmatpush1.msra.mxu0 0.0
  %341 = vmatprep.subr.mxu0 0.0
  %342 = vmatpush1.msra.mxu0 0.0
  %343 = vmatprep.subr.mxu0 0.0
  %344 = vmatpush1.msra.mxu0 0.0
  %345 = vmatprep.subr.mxu0 0.0
  %346 = vmatpush1.msra.mxu0 0.0
  %347 = vmatprep.subr.mxu0 0.0
  %348 = vmatpush1.msra.mxu0 0.0
  %349 = vmatprep.subr.mxu0 0.0
  %350 = vmatpush1.msra.mxu0 0.0
  %351 = vmatprep.subr.mxu0 0.0
  %352 = vmatpush1.msra.mxu0 0.0
  %353 = vmatprep.subr.mxu0 0.0
  %354 = vmatpush1.msra.mxu0 0.0
  %355 = vmatprep.subr.mxu0 0.0
  %356 = vmatpush1.msra.mxu0 0.0
  %357 = vmatprep.subr.mxu0 0.0
  %358 = vmatpush1.msra.mxu0 0.0
  %359 = vmatprep.subr.mxu0 0.0
  %360 = vmatpush1.msra.mxu0 0.0
  %361 = vmatprep.subr.mxu0 0.0
  %362 = vmatpush1.msra.mxu0 0.0
  %363 = vmatprep.subr.mxu0 0.0
  %364 = vmatpush1.msra.mxu0 0.0
  %365 = vmatprep.subr.mxu0 0.0
  %366 = vmatpush1.msra.mxu0 0.0
  %367 = vmatprep.subr.mxu0 0.0
  %368 = vmatpush1.msra.mxu0 0.0
  %369 = vmatprep.subr.mxu0 0.0
  %370 = vmatpush1.msra.mxu0 0.0
  %371 = vmatprep.subr.mxu0 0.0
  %372 = vmatpush1.msra.mxu0 0.0
  %373 = vmatprep.subr.mxu0 0.0
  %374 = vmatpush1.msra.mxu0 0.0
  %375 = vmatprep.subr.mxu0 0.0
  %376 = vmatpush1.msra.mxu0 0.0
  %377 = vmatprep.subr.mxu0 0.0
  %378 = vmatpush1.msra.mxu0 0.0
  %379 = vmatprep.subr.mxu0 0.0
  %380 = vmatpush1.msra.mxu0 0.0
  %381 = vmatprep.subr.mxu0 0.0
  %382 = vmatpush1.msra.mxu0 0.0
  %383 = vmatprep.subr.mxu0 0.0
  %384 = vmatpush1.msra.mxu0 0.0
  %385 = vmatprep.subr.mxu0 0.0
  %386 = vmatpush1.msra.mxu0 0.0
  %387 = vmatprep.subr.mxu0 0.0
  %388 = vmatpush1.msra.mxu0 0.0
  %389 = vmatprep.subr.mxu0 0.0
  %390 = vmatpush1.msra.mxu0 0.0
  %391 = vmatprep.subr.mxu0 0.0
  %392 = vmatpush1.msra.mxu0 0.0
  %393 = vmatprep.subr.mxu0 0.0
  %394 = vmatpush1.msra.mxu0 0.0
  %395 = vmatprep.subr.mxu0 0.0
  %396 = vmatpush1.msra.mxu0 0.0
  %397 = vmatprep.mubr.f32.mxu0 0.0
  %398 = vmatmul.mubr.f32.gmra.mrb[0].mxu0 %v322
  %v399 = vpop.f32.mrb[0].mxu0
  %v400 = vadd.f32 %v319, %v399
  %v401 = vpop.f32.mrb[0].mxu0
  %402 = vmatprep.mubr.f32.mxu0 0.0
  %403 = vmatmul.mubr.f32.gmra.mrb[0].mxu0 %v325
  %v404 = vpop.f32.mrb[0].mxu0
  %v405 = vadd.f32 %v319, %v404
  %v406 = vpop.f32.mrb[0].mxu0
  %407 = vmatprep.mubr.f32.mxu0 0.0
  %408 = vmatmul.mubr.f32.gmra.mrb[0].mxu0 %v328
  %v409 = vpop.f32.mrb[0].mxu0
  %v410 = vadd.f32 %v319, %v409
  %v411 = vpop.f32.mrb[0].mxu0
  %412 = vmatprep.mubr.f32.mxu0 0.0
  %413 = vmatmul.mubr.f32.gmra.mrb[0].mxu0 %v331
  %v414 = vpop.f32.mrb[0].mxu0
  %v415 = vadd.f32 %v319, %v414
  %v416 = vpop.f32.mrb[0].mxu0
  %417 = vdwg.mxu0
  %v418 = vmax.f32 %v400, 0.0
  %v419 = vmax.f32 %v405, 0.0
  %v420 = vmax.f32 %v410, 0.0
  %v421 = vmax.f32 %v415, 0.0
  %v422 = vlaneseq
  %v423 = vshrl.u32 %v422, 7
  %v424 = vsub.s32 0, %v423
  %v425 = vrot.slane %v58, %v424
  %v427 = vsel %vm307, %v418, 0
  %v430 = vsel %vm307, %v419, 0
  %v433 = vsel %vm307, %v420, 0
  %v436 = vsel %vm307, %v421, 0
  %438 = vmatprep.subr.mxu0 0.0
  %439 = vmatpush1.msra.mxu0 %v53
  %440 = vmatprep.subr.mxu0 0.0
  %441 = vmatpush1.msra.mxu0 0.0
  %442 = vmatprep.subr.mxu0 0.0
  %443 = vmatpush1.msra.mxu0 0.0
  %444 = vmatprep.subr.mxu0 0.0
  %445 = vmatpush1.msra.mxu0 0.0
  %446 = vmatprep.subr.mxu0 0.0
  %447 = vmatpush1.msra.mxu0 0.0
  %448 = vmatprep.subr.mxu0 0.0
  %449 = vmatpush1.msra.mxu0 0.0
  %450 = vmatprep.subr.mxu0 0.0
  %451 = vmatpush1.msra.mxu0 0.0
  %452 = vmatprep.subr.mxu0 0.0
  %453 = vmatpush1.msra.mxu0 0.0
  %454 = vmatprep.subr.mxu0 0.0
  %455 = vmatpush1.msra.mxu0 0.0
  %456 = vmatprep.subr.mxu0 0.0
  %457 = vmatpush1.msra.mxu0 0.0
  %458 = vmatprep.subr.mxu0 0.0
  %459 = vmatpush1.msra.mxu0 0.0
  %460 = vmatprep.subr.mxu0 0.0
  %461 = vmatpush1.msra.mxu0 0.0
  %462 = vmatprep.subr.mxu0 0.0
  %463 = vmatpush1.msra.mxu0 0.0
  %464 = vmatprep.subr.mxu0 0.0
  %465 = vmatpush1.msra.mxu0 0.0
  %466 = vmatprep.subr.mxu0 0.0
  %467 = vmatpush1.msra.mxu0 0.0
  %468 = vmatprep.subr.mxu0 0.0
  %469 = vmatpush1.msra.mxu0 0.0
  %470 = vmatprep.subr.mxu0 0.0
  %471 = vmatpush1.msra.mxu0 0.0
  %472 = vmatprep.subr.mxu0 0.0
  %473 = vmatpush1.msra.mxu0 0.0
  %474 = vmatprep.subr.mxu0 0.0
  %475 = vmatpush1.msra.mxu0 0.0
  %476 = vmatprep.subr.mxu0 0.0
  %477 = vmatpush1.msra.mxu0 0.0
  %478 = vmatprep.subr.mxu0 0.0
  %479 = vmatpush1.msra.mxu0 0.0
  %480 = vmatprep.subr.mxu0 0.0
  %481 = vmatpush1.msra.mxu0 0.0
  %482 = vmatprep.subr.mxu0 0.0
  %483 = vmatpush1.msra.mxu0 0.0
  %484 = vmatprep.subr.mxu0 0.0
  %485 = vmatpush1.msra.mxu0 0.0
  %486 = vmatprep.subr.mxu0 0.0
  %487 = vmatpush1.msra.mxu0 0.0
  %488 = vmatprep.subr.mxu0 0.0
  %489 = vmatpush1.msra.mxu0 0.0
  %490 = vmatprep.subr.mxu0 0.0
  %491 = vmatpush1.msra.mxu0 0.0
  %492 = vmatprep.subr.mxu0 0.0
  %493 = vmatpush1.msra.mxu0 0.0
  %494 = vmatprep.subr.mxu0 0.0
  %495 = vmatpush1.msra.mxu0 0.0
  %496 = vmatprep.subr.mxu0 0.0
  %497 = vmatpush1.msra.mxu0 0.0
  %498 = vmatprep.subr.mxu0 0.0
  %499 = vmatpush1.msra.mxu0 0.0
  %500 = vmatprep.subr.mxu0 0.0
  %501 = vmatpush1.msra.mxu0 0.0
  %502 = vmatprep.mubr.f32.mxu0 0.0
  %503 = vmatmul.mubr.f32.gmra.mrb[0].mxu0 %v427
  %v504 = vpop.f32.mrb[0].mxu0
  %v505 = vadd.f32 %v425, %v504
  %v506 = vpop.f32.mrb[0].mxu0
  %507 = vmatprep.mubr.f32.mxu0 0.0
  %508 = vmatmul.mubr.f32.gmra.mrb[0].mxu0 %v430
  %v509 = vpop.f32.mrb[0].mxu0
  %v510 = vadd.f32 %v425, %v509
  %v511 = vpop.f32.mrb[0].mxu0
  %512 = vmatprep.mubr.f32.mxu0 0.0
  %513 = vmatmul.mubr.f32.gmra.mrb[0].mxu0 %v433
  %v514 = vpop.f32.mrb[0].mxu0
  %v515 = vadd.f32 %v425, %v514
  %v516 = vpop.f32.mrb[0].mxu0
  %517 = vmatprep.mubr.f32.mxu0 0.0
  %518 = vmatmul.mubr.f32.gmra.mrb[0].mxu0 %v436
  %v519 = vpop.f32.mrb[0].mxu0
  %v520 = vadd.f32 %v425, %v519
  %v521 = vpop.f32.mrb[0].mxu0
  %522 = vdwg.mxu0
  %v523 = vmax.f32 %v505, 0.0
  %v524 = vmax.f32 %v510, 0.0
  %v525 = vmax.f32 %v515, 0.0
  %v526 = vmax.f32 %v520, 0.0
  %v527 = vlaneseq
  %v528 = vshrl.u32 %v527, 7
  %v529 = vsub.s32 0, %v528
  %v530 = vrot.slane %v59, %v529
  %v532 = vsel %vm307, %v523, 0
  %v535 = vsel %vm307, %v524, 0
  %v538 = vsel %vm307, %v525, 0
  %v541 = vsel %vm307, %v526, 0
  %543 = vmatprep.subr.mxu0 0.0
  %544 = vmatpush1.msra.mxu0 %v54
  %545 = vmatprep.subr.mxu0 0.0
  %546 = vmatpush1.msra.mxu0 0.0
  %547 = vmatprep.subr.mxu0 0.0
  %548 = vmatpush1.msra.mxu0 0.0
  %549 = vmatprep.subr.mxu0 0.0
  %550 = vmatpush1.msra.mxu0 0.0
  %551 = vmatprep.subr.mxu0 0.0
  %552 = vmatpush1.msra.mxu0 0.0
  %553 = vmatprep.subr.mxu0 0.0
  %554 = vmatpush1.msra.mxu0 0.0
  %555 = vmatprep.subr.mxu0 0.0
  %556 = vmatpush1.msra.mxu0 0.0
  %557 = vmatprep.subr.mxu0 0.0
  %558 = vmatpush1.msra.mxu0 0.0
  %559 = vmatprep.subr.mxu0 0.0
  %560 = vmatpush1.msra.mxu0 0.0
  %561 = vmatprep.subr.mxu0 0.0
  %562 = vmatpush1.msra.mxu0 0.0
  %563 = vmatprep.subr.mxu0 0.0
  %564 = vmatpush1.msra.mxu0 0.0
  %565 = vmatprep.subr.mxu0 0.0
  %566 = vmatpush1.msra.mxu0 0.0
  %567 = vmatprep.subr.mxu0 0.0
  %568 = vmatpush1.msra.mxu0 0.0
  %569 = vmatprep.subr.mxu0 0.0
  %570 = vmatpush1.msra.mxu0 0.0
  %571 = vmatprep.subr.mxu0 0.0
  %572 = vmatpush1.msra.mxu0 0.0
  %573 = vmatprep.subr.mxu0 0.0
  %574 = vmatpush1.msra.mxu0 0.0
  %575 = vmatprep.subr.mxu0 0.0
  %576 = vmatpush1.msra.mxu0 0.0
  %577 = vmatprep.subr.mxu0 0.0
  %578 = vmatpush1.msra.mxu0 0.0
  %579 = vmatprep.subr.mxu0 0.0
  %580 = vmatpush1.msra.mxu0 0.0
  %581 = vmatprep.subr.mxu0 0.0
  %582 = vmatpush1.msra.mxu0 0.0
  %583 = vmatprep.subr.mxu0 0.0
  %584 = vmatpush1.msra.mxu0 0.0
  %585 = vmatprep.subr.mxu0 0.0
  %586 = vmatpush1.msra.mxu0 0.0
  %587 = vmatprep.subr.mxu0 0.0
  %588 = vmatpush1.msra.mxu0 0.0
  %589 = vmatprep.subr.mxu0 0.0
  %590 = vmatpush1.msra.mxu0 0.0
  %591 = vmatprep.subr.mxu0 0.0
  %592 = vmatpush1.msra.mxu0 0.0
  %593 = vmatprep.subr.mxu0 0.0
  %594 = vmatpush1.msra.mxu0 0.0
  %595 = vmatprep.subr.mxu0 0.0
  %596 = vmatpush1.msra.mxu0 0.0
  %597 = vmatprep.subr.mxu0 0.0
  %598 = vmatpush1.msra.mxu0 0.0
  %599 = vmatprep.subr.mxu0 0.0
  %600 = vmatpush1.msra.mxu0 0.0
  %601 = vmatprep.subr.mxu0 0.0
  %602 = vmatpush1.msra.mxu0 0.0
  %603 = vmatprep.subr.mxu0 0.0
  %604 = vmatpush1.msra.mxu0 0.0
  %605 = vmatprep.subr.mxu0 0.0
  %606 = vmatpush1.msra.mxu0 0.0
  %607 = vmatprep.mubr.f32.mxu0 0.0
  %608 = vmatmul.mubr.f32.gmra.mrb[0].mxu0 %v532
  %v609 = vpop.f32.mrb[0].mxu0
  %v610 = vadd.f32 %v530, %v609
  %v611 = vpop.f32.mrb[0].mxu0
  %612 = vmatprep.mubr.f32.mxu0 0.0
  %613 = vmatmul.mubr.f32.gmra.mrb[0].mxu0 %v535
  %v614 = vpop.f32.mrb[0].mxu0
  %v615 = vadd.f32 %v530, %v614
  %v616 = vpop.f32.mrb[0].mxu0
  %617 = vmatprep.mubr.f32.mxu0 0.0
  %618 = vmatmul.mubr.f32.gmra.mrb[0].mxu0 %v538
  %v619 = vpop.f32.mrb[0].mxu0
  %v620 = vadd.f32 %v530, %v619
  %v621 = vpop.f32.mrb[0].mxu0
  %622 = vmatprep.mubr.f32.mxu0 0.0
  %623 = vmatmul.mubr.f32.gmra.mrb[0].mxu0 %v541
  %v624 = vpop.f32.mrb[0].mxu0
  %v625 = vadd.f32 %v530, %v624
  %v626 = vpop.f32.mrb[0].mxu0
  %627 = vdwg.mxu0
  %v628 = vmax.f32 %v610, 0.0
  %v629 = vmax.f32 %v615, 0.0
  %v630 = vmax.f32 %v620, 0.0
  %v631 = vmax.f32 %v625, 0.0
  %v632 = vlaneseq
  %v633 = vshrl.u32 %v632, 7
  %v634 = vsub.s32 0, %v633
  %v635 = vrot.slane %v60, %v634
  %v637 = vsel %vm307, %v628, 0
  %v640 = vsel %vm307, %v629, 0
  %v643 = vsel %vm307, %v630, 0
  %v646 = vsel %vm307, %v631, 0
  %648 = vmatprep.subr.mxu0 0.0
  %649 = vmatpush1.msra.mxu0 %v55
  %650 = vmatprep.subr.mxu0 0.0
  %651 = vmatpush1.msra.mxu0 0.0
  %652 = vmatprep.subr.mxu0 0.0
  %653 = vmatpush1.msra.mxu0 0.0
  %654 = vmatprep.subr.mxu0 0.0
  %655 = vmatpush1.msra.mxu0 0.0
  %656 = vmatprep.subr.mxu0 0.0
  %657 = vmatpush1.msra.mxu0 0.0
  %658 = vmatprep.subr.mxu0 0.0
  %659 = vmatpush1.msra.mxu0 0.0
  %660 = vmatprep.subr.mxu0 0.0
  %661 = vmatpush1.msra.mxu0 0.0
  %662 = vmatprep.subr.mxu0 0.0
  %663 = vmatpush1.msra.mxu0 0.0
  %664 = vmatprep.subr.mxu0 0.0
  %665 = vmatpush1.msra.mxu0 0.0
  %666 = vmatprep.subr.mxu0 0.0
  %667 = vmatpush1.msra.mxu0 0.0
  %668 = vmatprep.subr.mxu0 0.0
  %669 = vmatpush1.msra.mxu0 0.0
  %670 = vmatprep.subr.mxu0 0.0
  %671 = vmatpush1.msra.mxu0 0.0
  %672 = vmatprep.subr.mxu0 0.0
  %673 = vmatpush1.msra.mxu0 0.0
  %674 = vmatprep.subr.mxu0 0.0
  %675 = vmatpush1.msra.mxu0 0.0
  %676 = vmatprep.subr.mxu0 0.0
  %677 = vmatpush1.msra.mxu0 0.0
  %678 = vmatprep.subr.mxu0 0.0
  %679 = vmatpush1.msra.mxu0 0.0
  %680 = vmatprep.subr.mxu0 0.0
  %681 = vmatpush1.msra.mxu0 0.0
  %682 = vmatprep.subr.mxu0 0.0
  %683 = vmatpush1.msra.mxu0 0.0
  %684 = vmatprep.subr.mxu0 0.0
  %685 = vmatpush1.msra.mxu0 0.0
  %686 = vmatprep.subr.mxu0 0.0
  %687 = vmatpush1.msra.mxu0 0.0
  %688 = vmatprep.subr.mxu0 0.0
  %689 = vmatpush1.msra.mxu0 0.0
  %690 = vmatprep.subr.mxu0 0.0
  %691 = vmatpush1.msra.mxu0 0.0
  %692 = vmatprep.subr.mxu0 0.0
  %693 = vmatpush1.msra.mxu0 0.0
  %694 = vmatprep.subr.mxu0 0.0
  %695 = vmatpush1.msra.mxu0 0.0
  %696 = vmatprep.subr.mxu0 0.0
  %697 = vmatpush1.msra.mxu0 0.0
  %698 = vmatprep.subr.mxu0 0.0
  %699 = vmatpush1.msra.mxu0 0.0
  %700 = vmatprep.subr.mxu0 0.0
  %701 = vmatpush1.msra.mxu0 0.0
  %702 = vmatprep.subr.mxu0 0.0
  %703 = vmatpush1.msra.mxu0 0.0
  %704 = vmatprep.subr.mxu0 0.0
  %705 = vmatpush1.msra.mxu0 0.0
  %706 = vmatprep.subr.mxu0 0.0
  %707 = vmatpush1.msra.mxu0 0.0
  %708 = vmatprep.subr.mxu0 0.0
  %709 = vmatpush1.msra.mxu0 0.0
  %710 = vmatprep.subr.mxu0 0.0
  %711 = vmatpush1.msra.mxu0 0.0
  %712 = vmatprep.mubr.f32.mxu0 0.0
  %713 = vmatmul.mubr.f32.gmra.mrb[0].mxu0 %v637
  %v714 = vpop.f32.mrb[0].mxu0
  %v715 = vadd.f32 %v635, %v714
  %v716 = vpop.f32.mrb[0].mxu0
  %717 = vmatprep.mubr.f32.mxu0 0.0
  %718 = vmatmul.mubr.f32.gmra.mrb[0].mxu0 %v640
  %v719 = vpop.f32.mrb[0].mxu0
  %v720 = vadd.f32 %v635, %v719
  %v721 = vpop.f32.mrb[0].mxu0
  %722 = vmatprep.mubr.f32.mxu0 0.0
  %723 = vmatmul.mubr.f32.gmra.mrb[0].mxu0 %v643
  %v724 = vpop.f32.mrb[0].mxu0
  %v725 = vadd.f32 %v635, %v724
  %v726 = vpop.f32.mrb[0].mxu0
  %727 = vmatprep.mubr.f32.mxu0 0.0
  %728 = vmatmul.mubr.f32.gmra.mrb[0].mxu0 %v646
  %v729 = vpop.f32.mrb[0].mxu0
  %v730 = vadd.f32 %v635, %v729
  %v731 = vpop.f32.mrb[0].mxu0
  %732 = vdwg.mxu0
  %733 = vst.msk [vmem:[%s2] sm:$0xff] %vm307, %v715
  %734 = vst.msk [vmem:[%s2 + $0x8] sm:$0xff] %vm307, %v720
  %735 = vst.msk [vmem:[%s2 + $0x10] sm:$0xff] %vm307, %v725
  %736 = vst.msk [vmem:[%s2 + $0x18] sm:$0xff] %vm307, %v730
  // Predicated region
  $region10: #{model_forward.1} parent=0 // pred_check
    _
  $region11: #{model_forward.1} parent=0 // pred_check_branch
    %738 = sbr.rel (0) target = $region13
  $region12: #{model_forward.1} parent=0 // pred_region
    _
  $region13: #{model_forward.1} parent=0 // pred_fallthru
    _
  // Predicated region
  $region14: #{model_forward.1} parent=0 // pred_check
    _
  $region15: #{model_forward.1} parent=0 // pred_check_branch
    %740 = sbr.rel (0) target = $region17
  $region16: #{model_forward.1} parent=0 // pred_region
    _
  $region17: #{model_forward.1} parent=0 // pred_fallthru
    _

</llo_original>
